<compile_context>
chip_gen: v7x
topology: tpu7x:2x2x1
jax: 0.10.0
libtpu: 0.0.40
codegen_flags: <defaults>
</compile_context>

<pallas_src>
import functools

import jax
import jax.numpy as jnp
from jax.experimental import pallas as pl
from jax.experimental.pallas import tpu as pltpu


def _dilate_kernel(x_ref, o_ref, t_ref, *, w, dilation):
    # x_ref: (S, W*d)   o_ref: (S, W)   t_ref: VMEM scratch (W*d, S).
    t_ref[...] = x_ref[...].T                        # XLU transpose into scratch
    kept = t_ref[pl.ds(0, w, stride=dilation), :]    # native sublane-strided read
    o_ref[...] = kept.T                              # back to lane-dense, store


def _choose_lane_width(m, dilation, cap=2048):
    """Largest multiple-of-128 divisor of m (<= cap); prefer rows % 8 == 0."""
    cands = [c for c in range(128, min(m, cap) + 1, 128) if m % c == 0]
    if not cands:
        return None
    pref = [c for c in cands if (m // c) % 8 == 0]
    return max(pref) if pref else max(cands)


def _choose_row_tile(rows, w, dilation, itemsize, budget=12 * 1024 * 1024):
    """Largest multiple-of-8 divisor of rows whose VMEM footprint fits budget."""
    if rows % 8 != 0:
        return rows  # full extent (legal: block dim == full array dim)
    best = 8
    s = 8
    cap = min(rows, 1024)
    while s <= cap:
        if rows % s == 0:
            vmem = (2 * s * w * dilation          # input tile, double-buffered
                    + 2 * s * w                   # output tile, double-buffered
                    + w * dilation * max(s, 128)  # transpose scratch (lane-padded)
                    ) * itemsize
            if vmem <= budget:
                best = s
        s += 8
    return best


@functools.partial(jax.jit, static_argnames=("k", "dilation"))
def dense_dilated(edge_index, k, dilation):
    """Pallas implementation of DenseDilated.forward (deterministic path).

    edge_index: (2, B, N, k*dilation) int32
    returns:    (2, B, N, k)          int32
    """
    two, B, N, KD = edge_index.shape
    assert two == 2
    assert KD == k * dilation

    if dilation == 1:
        # [::1] is the identity; torch returns a view — no copy needed.
        return edge_index

    itemsize = jnp.dtype(edge_index.dtype).itemsize
    m = two * B * N * k                      # number of kept (output) elements

    w = _choose_lane_width(m, dilation)
    if w is None:
        # Tiny / oddly shaped inputs: one full-array block (always legal).
        w, rows, s = m, 1, 1
    else:
        rows = m // w
        s = _choose_row_tile(rows, w, dilation, itemsize)
    grid = (rows // s,)

    # Free row-major reshape (no data movement):
    #   out2d[r, c] = in2d[r, c*dilation]
    x2d = edge_index.reshape(rows, w * dilation)

    kernel = functools.partial(_dilate_kernel, w=w, dilation=dilation)
    out2d = pl.pallas_call(
        kernel,
        out_shape=jax.ShapeDtypeStruct((rows, w), edge_index.dtype),
        grid=grid,
        in_specs=[pl.BlockSpec((s, w * dilation), lambda i: (i, 0))],
        out_specs=pl.BlockSpec((s, w), lambda i: (i, 0)),
        scratch_shapes=[pltpu.VMEM((w * dilation, s), edge_index.dtype)],
        compiler_params=pltpu.CompilerParams(
            dimension_semantics=("parallel",),
            vmem_limit_bytes=32 * 1024 * 1024,
        ),
    )(x2d)

    # Free row-major reshape back to the torch layout.
    return out2d.reshape(two, B, N, k)


if __name__ == "__main__":
    key = jax.random.PRNGKey(0)

    # Module config: k neighbors kept, dilation 2 (ViG-style graph sizes, small).
    k = 8
    dilation = 2
    B, N = 2, 128
    KD = k * dilation

    # edge_index holds neighbor indices in [0, N).
    edge_index = jax.random.randint(
        key, (2, B, N, KD), minval=0, maxval=N, dtype=jnp.int32)

    out = jax.block_until_ready(dense_dilated(edge_index, k, dilation))
    ref = edge_index[:, :, :, ::dilation]
    assert out.shape == (2, B, N, k), out.shape
    assert out.dtype == edge_index.dtype
    assert bool(jnp.all(out == ref))

    # Also exercise a larger dilation.
    out4 = jax.block_until_ready(dense_dilated(edge_index, 4, 4))
    assert out4.shape == (2, B, N, 4)
    assert bool(jnp.all(out4 == edge_index[:, :, :, ::4]))

    # dilation == 1 identity path.
    out1 = jax.block_until_ready(dense_dilated(edge_index, KD, 1))
    assert bool(jnp.all(out1 == edge_index))

    print("KERNEL_OK")
</pallas_src>

<mosaic_0001>
module attributes {stable_mosaic.version = 11 : i64} {
  func.func @_dilate_kernel(%arg0: i32, %arg1: memref<8x1024xi32, #tpu.memory_space<vmem>>, %arg2: memref<8x512xi32, #tpu.memory_space<vmem>>, %arg3: memref<1024x8xi32, #tpu.memory_space<vmem>>) attributes {dimension_semantics = [#tpu.dimension_semantics<parallel>], iteration_bounds = array<i64: 1>, scalar_prefetch = 0 : i64, scratch_operands = 1 : i64, tpu.core_type = #tpu.core_type<tc>, window_params = [{transform_indices = @transform_0, window_bounds = array<i64: 8, 1024>}, {transform_indices = @transform_1, window_bounds = array<i64: 8, 512>}]} {
    %c0 = arith.constant 0 : index
    %c0_0 = arith.constant 0 : index
    %0 = vector.load %arg1[%c0, %c0_0] : memref<8x1024xi32, #tpu.memory_space<vmem>>, vector<8x1024xi32>
    %1 = tpu.transpose %0, [1, 0] : vector<8x1024xi32> -> vector<1024x8xi32>
    %c0_1 = arith.constant 0 : index
    %c0_2 = arith.constant 0 : index
    %2 = vector.load %arg3[%c0_1, %c0_2] : memref<1024x8xi32, #tpu.memory_space<vmem>>, vector<1024x8xi32>
    tpu.vector_store %arg3[%c0_1, %c0_2], %1 {strides = array<i32>} : memref<1024x8xi32, #tpu.memory_space<vmem>>, vector<1024x8xi32>,
    %c0_3 = arith.constant 0 : index
    %c0_4 = arith.constant 0 : index
    %3 = tpu.strided_load %arg3[%c0_3, %c0_4] {strides = array<i32: 2, 1>} : memref<1024x8xi32, #tpu.memory_space<vmem>>, vector<512x8xi32>
    %4 = tpu.transpose %3, [1, 0] : vector<512x8xi32> -> vector<8x512xi32>
    %c0_5 = arith.constant 0 : index
    %c0_6 = arith.constant 0 : index
    %5 = vector.load %arg2[%c0_5, %c0_6] : memref<8x512xi32, #tpu.memory_space<vmem>>, vector<8x512xi32>
    tpu.vector_store %arg2[%c0_5, %c0_6], %4 {strides = array<i32>} : memref<8x512xi32, #tpu.memory_space<vmem>>, vector<8x512xi32>,
    return
  }
  func.func @transform_0(%arg0: i32) -> (i32, i32) {
    %c0_i32 = arith.constant 0 : i32
    %c0_i32_0 = arith.constant 0 : i32
    return %arg0, %c0_i32 : i32, i32
  }
  func.func @transform_1(%arg0: i32) -> (i32, i32) {
    %c0_i32 = arith.constant 0 : i32
    %c0_i32_0 = arith.constant 0 : i32
    return %arg0, %c0_i32 : i32, i32
  }
}

</mosaic_0001>

<llo_original>
// kernel: dense_dilated.1
$region0: #{dense_dilated.1}
  #allocation0 [shape = 'u32[]', space=smem, size = 0x4, offset = 0x4, fixed_abs, tag = 'smem constant byte address 0x4 - core index']
  #allocation1 [shape = 'u32[144,128]{1,0:T(1,128)}', space=vmem, size = 0x12000, scoped, tag = 'internal scratch']
  #allocation2 [shape = 's32[1024,8]{1,0:T(8,128)}', space=vmem, size = 0x80000, scoped, tag = 'scratch operand']
  %s0 = inlined_call_operand.vmem [shape: s32[8,1024], index: 0, kind: input, shape index: {}]
  %s1 = inlined_call_operand.vmem [shape: s32[8,512], index: 1, kind: output, shape index: {}]
  %s2 = sld [smem:[#allocation0]]
  $region14: #{dense_dilated.1} parent=0
    _
  %s4 = ssub.s32 1, %s2
  %s5 = scalar_select 0, %s4, %s2
  // Predicated region
  $region2: #{dense_dilated.1} parent=0 // pred_check
    _
  $region3: #{dense_dilated.1} parent=0 // pred_check_branch
    %7 = sbr.rel (0) target = $region5
  $region4: #{dense_dilated.1} parent=0 // pred_region
    _
  $region5: #{dense_dilated.1} parent=0 // pred_fallthru
    _
  %v8 = vld [vmem:[%s0] sm:$0xff]
  %v9 = vld [vmem:[%s0 + $0x8] sm:$0xff]
  %v10 = vld [vmem:[%s0 + $0x10] sm:$0xff]
  %v11 = vld [vmem:[%s0 + $0x18] sm:$0xff]
  %v12 = vld [vmem:[%s0 + $0x20] sm:$0xff]
  %v13 = vld [vmem:[%s0 + $0x28] sm:$0xff]
  %v14 = vld [vmem:[%s0 + $0x30] sm:$0xff]
  %v15 = vld [vmem:[%s0 + $0x38] sm:$0xff]
  %16 = vxpose.xlu0.b32.start [1/16] %v8, 128
  %17 = vxpose.xlu0.b32.cont [2/16] 0, 128
  %18 = vxpose.xlu0.b32.cont [3/16] 0, 128
  %19 = vxpose.xlu0.b32.cont [4/16] 0, 128
  %20 = vxpose.xlu0.b32.cont [5/16] 0, 128
  %21 = vxpose.xlu0.b32.cont [6/16] 0, 128
  %22 = vxpose.xlu0.b32.cont [7/16] 0, 128
  %23 = vxpose.xlu0.b32.cont [8/16] 0, 128
  %24 = vxpose.xlu0.b32.cont [9/16] 0, 128
  %25 = vxpose.xlu0.b32.cont [10/16] 0, 128
  %26 = vxpose.xlu0.b32.cont [11/16] 0, 128
  %27 = vxpose.xlu0.b32.cont [12/16] 0, 128
  %28 = vxpose.xlu0.b32.cont [13/16] 0, 128
  %29 = vxpose.xlu0.b32.cont [14/16] 0, 128
  %30 = vxpose.xlu0.b32.cont [15/16] 0, 128
  %31 = vxpose.xlu0.b32.end [16/16] 0, 128
  %v32 = vpop.trf.xlu0
  %v33 = vpop.trf.xlu0
  %v34 = vpop.trf.xlu0
  %v35 = vpop.trf.xlu0
  %v36 = vpop.trf.xlu0
  %v37 = vpop.trf.xlu0
  %v38 = vpop.trf.xlu0
  %v39 = vpop.trf.xlu0
  %v40 = vpop.trf.xlu0
  %v41 = vpop.trf.xlu0
  %v42 = vpop.trf.xlu0
  %v43 = vpop.trf.xlu0
  %v44 = vpop.trf.xlu0
  %v45 = vpop.trf.xlu0
  %v46 = vpop.trf.xlu0
  %v47 = vpop.trf.xlu0
  %48 = vxpose.xlu0.b32.start [1/16] %v9, 128
  %49 = vxpose.xlu0.b32.cont [2/16] 0, 128
  %50 = vxpose.xlu0.b32.cont [3/16] 0, 128
  %51 = vxpose.xlu0.b32.cont [4/16] 0, 128
  %52 = vxpose.xlu0.b32.cont [5/16] 0, 128
  %53 = vxpose.xlu0.b32.cont [6/16] 0, 128
  %54 = vxpose.xlu0.b32.cont [7/16] 0, 128
  %55 = vxpose.xlu0.b32.cont [8/16] 0, 128
  %56 = vxpose.xlu0.b32.cont [9/16] 0, 128
  %57 = vxpose.xlu0.b32.cont [10/16] 0, 128
  %58 = vxpose.xlu0.b32.cont [11/16] 0, 128
  %59 = vxpose.xlu0.b32.cont [12/16] 0, 128
  %60 = vxpose.xlu0.b32.cont [13/16] 0, 128
  %61 = vxpose.xlu0.b32.cont [14/16] 0, 128
  %62 = vxpose.xlu0.b32.cont [15/16] 0, 128
  %63 = vxpose.xlu0.b32.end [16/16] 0, 128
  %v64 = vpop.trf.xlu0
  %v65 = vpop.trf.xlu0
  %v66 = vpop.trf.xlu0
  %v67 = vpop.trf.xlu0
  %v68 = vpop.trf.xlu0
  %v69 = vpop.trf.xlu0
  %v70 = vpop.trf.xlu0
  %v71 = vpop.trf.xlu0
  %v72 = vpop.trf.xlu0
  %v73 = vpop.trf.xlu0
  %v74 = vpop.trf.xlu0
  %v75 = vpop.trf.xlu0
  %v76 = vpop.trf.xlu0
  %v77 = vpop.trf.xlu0
  %v78 = vpop.trf.xlu0
  %v79 = vpop.trf.xlu0
  %80 = vxpose.xlu0.b32.start [1/16] %v10, 128
  %81 = vxpose.xlu0.b32.cont [2/16] 0, 128
  %82 = vxpose.xlu0.b32.cont [3/16] 0, 128
  %83 = vxpose.xlu0.b32.cont [4/16] 0, 128
  %84 = vxpose.xlu0.b32.cont [5/16] 0, 128
  %85 = vxpose.xlu0.b32.cont [6/16] 0, 128
  %86 = vxpose.xlu0.b32.cont [7/16] 0, 128
  %87 = vxpose.xlu0.b32.cont [8/16] 0, 128
  %88 = vxpose.xlu0.b32.cont [9/16] 0, 128
  %89 = vxpose.xlu0.b32.cont [10/16] 0, 128
  %90 = vxpose.xlu0.b32.cont [11/16] 0, 128
  %91 = vxpose.xlu0.b32.cont [12/16] 0, 128
  %92 = vxpose.xlu0.b32.cont [13/16] 0, 128
  %93 = vxpose.xlu0.b32.cont [14/16] 0, 128
  %94 = vxpose.xlu0.b32.cont [15/16] 0, 128
  %95 = vxpose.xlu0.b32.end [16/16] 0, 128
  %v96 = vpop.trf.xlu0
  %v97 = vpop.trf.xlu0
  %v98 = vpop.trf.xlu0
  %v99 = vpop.trf.xlu0
  %v100 = vpop.trf.xlu0
  %v101 = vpop.trf.xlu0
  %v102 = vpop.trf.xlu0
  %v103 = vpop.trf.xlu0
  %v104 = vpop.trf.xlu0
  %v105 = vpop.trf.xlu0
  %v106 = vpop.trf.xlu0
  %v107 = vpop.trf.xlu0
  %v108 = vpop.trf.xlu0
  %v109 = vpop.trf.xlu0
  %v110 = vpop.trf.xlu0
  %v111 = vpop.trf.xlu0
  %112 = vxpose.xlu0.b32.start [1/16] %v11, 128
  %113 = vxpose.xlu0.b32.cont [2/16] 0, 128
  %114 = vxpose.xlu0.b32.cont [3/16] 0, 128
  %115 = vxpose.xlu0.b32.cont [4/16] 0, 128
  %116 = vxpose.xlu0.b32.cont [5/16] 0, 128
  %117 = vxpose.xlu0.b32.cont [6/16] 0, 128
  %118 = vxpose.xlu0.b32.cont [7/16] 0, 128
  %119 = vxpose.xlu0.b32.cont [8/16] 0, 128
  %120 = vxpose.xlu0.b32.cont [9/16] 0, 128
  %121 = vxpose.xlu0.b32.cont [10/16] 0, 128
  %122 = vxpose.xlu0.b32.cont [11/16] 0, 128
  %123 = vxpose.xlu0.b32.cont [12/16] 0, 128
  %124 = vxpose.xlu0.b32.cont [13/16] 0, 128
  %125 = vxpose.xlu0.b32.cont [14/16] 0, 128
  %126 = vxpose.xlu0.b32.cont [15/16] 0, 128
  %127 = vxpose.xlu0.b32.end [16/16] 0, 128
  %v128 = vpop.trf.xlu0
  %v129 = vpop.trf.xlu0
  %v130 = vpop.trf.xlu0
  %v131 = vpop.trf.xlu0
  %v132 = vpop.trf.xlu0
  %v133 = vpop.trf.xlu0
  %v134 = vpop.trf.xlu0
  %v135 = vpop.trf.xlu0
  %v136 = vpop.trf.xlu0
  %v137 = vpop.trf.xlu0
  %v138 = vpop.trf.xlu0
  %v139 = vpop.trf.xlu0
  %v140 = vpop.trf.xlu0
  %v141 = vpop.trf.xlu0
  %v142 = vpop.trf.xlu0
  %v143 = vpop.trf.xlu0
  %144 = vxpose.xlu0.b32.start [1/16] %v12, 128
  %145 = vxpose.xlu0.b32.cont [2/16] 0, 128
  %146 = vxpose.xlu0.b32.cont [3/16] 0, 128
  %147 = vxpose.xlu0.b32.cont [4/16] 0, 128
  %148 = vxpose.xlu0.b32.cont [5/16] 0, 128
  %149 = vxpose.xlu0.b32.cont [6/16] 0, 128
  %150 = vxpose.xlu0.b32.cont [7/16] 0, 128
  %151 = vxpose.xlu0.b32.cont [8/16] 0, 128
  %152 = vxpose.xlu0.b32.cont [9/16] 0, 128
  %153 = vxpose.xlu0.b32.cont [10/16] 0, 128
  %154 = vxpose.xlu0.b32.cont [11/16] 0, 128
  %155 = vxpose.xlu0.b32.cont [12/16] 0, 128
  %156 = vxpose.xlu0.b32.cont [13/16] 0, 128
  %157 = vxpose.xlu0.b32.cont [14/16] 0, 128
  %158 = vxpose.xlu0.b32.cont [15/16] 0, 128
  %159 = vxpose.xlu0.b32.end [16/16] 0, 128
  %v160 = vpop.trf.xlu0
  %v161 = vpop.trf.xlu0
  %v162 = vpop.trf.xlu0
  %v163 = vpop.trf.xlu0
  %v164 = vpop.trf.xlu0
  %v165 = vpop.trf.xlu0
  %v166 = vpop.trf.xlu0
  %v167 = vpop.trf.xlu0
  %v168 = vpop.trf.xlu0
  %v169 = vpop.trf.xlu0
  %v170 = vpop.trf.xlu0
  %v171 = vpop.trf.xlu0
  %v172 = vpop.trf.xlu0
  %v173 = vpop.trf.xlu0
  %v174 = vpop.trf.xlu0
  %v175 = vpop.trf.xlu0
  %176 = vxpose.xlu0.b32.start [1/16] %v13, 128
  %177 = vxpose.xlu0.b32.cont [2/16] 0, 128
  %178 = vxpose.xlu0.b32.cont [3/16] 0, 128
  %179 = vxpose.xlu0.b32.cont [4/16] 0, 128
  %180 = vxpose.xlu0.b32.cont [5/16] 0, 128
  %181 = vxpose.xlu0.b32.cont [6/16] 0, 128
  %182 = vxpose.xlu0.b32.cont [7/16] 0, 128
  %183 = vxpose.xlu0.b32.cont [8/16] 0, 128
  %184 = vxpose.xlu0.b32.cont [9/16] 0, 128
  %185 = vxpose.xlu0.b32.cont [10/16] 0, 128
  %186 = vxpose.xlu0.b32.cont [11/16] 0, 128
  %187 = vxpose.xlu0.b32.cont [12/16] 0, 128
  %188 = vxpose.xlu0.b32.cont [13/16] 0, 128
  %189 = vxpose.xlu0.b32.cont [14/16] 0, 128
  %190 = vxpose.xlu0.b32.cont [15/16] 0, 128
  %191 = vxpose.xlu0.b32.end [16/16] 0, 128
  %v192 = vpop.trf.xlu0
  %v193 = vpop.trf.xlu0
  %v194 = vpop.trf.xlu0
  %v195 = vpop.trf.xlu0
  %v196 = vpop.trf.xlu0
  %v197 = vpop.trf.xlu0
  %v198 = vpop.trf.xlu0
  %v199 = vpop.trf.xlu0
  %v200 = vpop.trf.xlu0
  %v201 = vpop.trf.xlu0
  %v202 = vpop.trf.xlu0
  %v203 = vpop.trf.xlu0
  %v204 = vpop.trf.xlu0
  %v205 = vpop.trf.xlu0
  %v206 = vpop.trf.xlu0
  %v207 = vpop.trf.xlu0
  %208 = vxpose.xlu0.b32.start [1/16] %v14, 128
  %209 = vxpose.xlu0.b32.cont [2/16] 0, 128
  %210 = vxpose.xlu0.b32.cont [3/16] 0, 128
  %211 = vxpose.xlu0.b32.cont [4/16] 0, 128
  %212 = vxpose.xlu0.b32.cont [5/16] 0, 128
  %213 = vxpose.xlu0.b32.cont [6/16] 0, 128
  %214 = vxpose.xlu0.b32.cont [7/16] 0, 128
  %215 = vxpose.xlu0.b32.cont [8/16] 0, 128
  %216 = vxpose.xlu0.b32.cont [9/16] 0, 128
  %217 = vxpose.xlu0.b32.cont [10/16] 0, 128
  %218 = vxpose.xlu0.b32.cont [11/16] 0, 128
  %219 = vxpose.xlu0.b32.cont [12/16] 0, 128
  %220 = vxpose.xlu0.b32.cont [13/16] 0, 128
  %221 = vxpose.xlu0.b32.cont [14/16] 0, 128
  %222 = vxpose.xlu0.b32.cont [15/16] 0, 128
  %223 = vxpose.xlu0.b32.end [16/16] 0, 128
  %v224 = vpop.trf.xlu0
  %v225 = vpop.trf.xlu0
  %v226 = vpop.trf.xlu0
  %v227 = vpop.trf.xlu0
  %v228 = vpop.trf.xlu0
  %v229 = vpop.trf.xlu0
  %v230 = vpop.trf.xlu0
  %v231 = vpop.trf.xlu0
  %v232 = vpop.trf.xlu0
  %v233 = vpop.trf.xlu0
  %v234 = vpop.trf.xlu0
  %v235 = vpop.trf.xlu0
  %v236 = vpop.trf.xlu0
  %v237 = vpop.trf.xlu0
  %v238 = vpop.trf.xlu0
  %v239 = vpop.trf.xlu0
  %240 = vxpose.xlu0.b32.start [1/16] %v15, 128
  %241 = vxpose.xlu0.b32.cont [2/16] 0, 128
  %242 = vxpose.xlu0.b32.cont [3/16] 0, 128
  %243 = vxpose.xlu0.b32.cont [4/16] 0, 128
  %244 = vxpose.xlu0.b32.cont [5/16] 0, 128
  %245 = vxpose.xlu0.b32.cont [6/16] 0, 128
  %246 = vxpose.xlu0.b32.cont [7/16] 0, 128
  %247 = vxpose.xlu0.b32.cont [8/16] 0, 128
  %248 = vxpose.xlu0.b32.cont [9/16] 0, 128
  %249 = vxpose.xlu0.b32.cont [10/16] 0, 128
  %250 = vxpose.xlu0.b32.cont [11/16] 0, 128
  %251 = vxpose.xlu0.b32.cont [12/16] 0, 128
  %252 = vxpose.xlu0.b32.cont [13/16] 0, 128
  %253 = vxpose.xlu0.b32.cont [14/16] 0, 128
  %254 = vxpose.xlu0.b32.cont [15/16] 0, 128
  %255 = vxpose.xlu0.b32.end [16/16] 0, 128
  %v256 = vpop.trf.xlu0
  %v257 = vpop.trf.xlu0
  %v258 = vpop.trf.xlu0
  %v259 = vpop.trf.xlu0
  %v260 = vpop.trf.xlu0
  %v261 = vpop.trf.xlu0
  %v262 = vpop.trf.xlu0
  %v263 = vpop.trf.xlu0
  %v264 = vpop.trf.xlu0
  %v265 = vpop.trf.xlu0
  %v266 = vpop.trf.xlu0
  %v267 = vpop.trf.xlu0
  %v268 = vpop.trf.xlu0
  %v269 = vpop.trf.xlu0
  %v270 = vpop.trf.xlu0
  %v271 = vpop.trf.xlu0
  %vm272 = vcmask 64512
  %273 = vst.msk [vmem:[#allocation2] sm:$0xff] %vm272, %v32
  %274 = vst.msk [vmem:[#allocation2 + $0x8] sm:$0xff] %vm272, %v33
  %275 = vst.msk [vmem:[#allocation2 + $0x10] sm:$0xff] %vm272, %v34
  %276 = vst.msk [vmem:[#allocation2 + $0x18] sm:$0xff] %vm272, %v35
  %277 = vst.msk [vmem:[#allocation2 + $0x20] sm:$0xff] %vm272, %v36
  %278 = vst.msk [vmem:[#allocation2 + $0x28] sm:$0xff] %vm272, %v37
  %279 = vst.msk [vmem:[#allocation2 + $0x30] sm:$0xff] %vm272, %v38
  %280 = vst.msk [vmem:[#allocation2 + $0x38] sm:$0xff] %vm272, %v39
  %281 = vst.msk [vmem:[#allocation2 + $0x40] sm:$0xff] %vm272, %v40
  %282 = vst.msk [vmem:[#allocation2 + $0x48] sm:$0xff] %vm272, %v41
  %283 = vst.msk [vmem:[#allocation2 + $0x50] sm:$0xff] %vm272, %v42
  %284 = vst.msk [vmem:[#allocation2 + $0x58] sm:$0xff] %vm272, %v43
  %285 = vst.msk [vmem:[#allocation2 + $0x60] sm:$0xff] %vm272, %v44
  %286 = vst.msk [vmem:[#allocation2 + $0x68] sm:$0xff] %vm272, %v45
  %287 = vst.msk [vmem:[#allocation2 + $0x70] sm:$0xff] %vm272, %v46
  %288 = vst.msk [vmem:[#allocation2 + $0x78] sm:$0xff] %vm272, %v47
  %289 = vst.msk [vmem:[#allocation2 + $0x80] sm:$0xff] %vm272, %v64
  %290 = vst.msk [vmem:[#allocation2 + $0x88] sm:$0xff] %vm272, %v65
  %291 = vst.msk [vmem:[#allocation2 + $0x90] sm:$0xff] %vm272, %v66
  %292 = vst.msk [vmem:[#allocation2 + $0x98] sm:$0xff] %vm272, %v67
  %293 = vst.msk [vmem:[#allocation2 + $0xa0] sm:$0xff] %vm272, %v68
  %294 = vst.msk [vmem:[#allocation2 + $0xa8] sm:$0xff] %vm272, %v69
  %295 = vst.msk [vmem:[#allocation2 + $0xb0] sm:$0xff] %vm272, %v70
  %296 = vst.msk [vmem:[#allocation2 + $0xb8] sm:$0xff] %vm272, %v71
  %297 = vst.msk [vmem:[#allocation2 + $0xc0] sm:$0xff] %vm272, %v72
  %298 = vst.msk [vmem:[#allocation2 + $0xc8] sm:$0xff] %vm272, %v73
  %299 = vst.msk [vmem:[#allocation2 + $0xd0] sm:$0xff] %vm272, %v74
  %300 = vst.msk [vmem:[#allocation2 + $0xd8] sm:$0xff] %vm272, %v75
  %301 = vst.msk [vmem:[#allocation2 + $0xe0] sm:$0xff] %vm272, %v76
  %302 = vst.msk [vmem:[#allocation2 + $0xe8] sm:$0xff] %vm272, %v77
  %303 = vst.msk [vmem:[#allocation2 + $0xf0] sm:$0xff] %vm272, %v78
  %304 = vst.msk [vmem:[#allocation2 + $0xf8] sm:$0xff] %vm272, %v79
  %305 = vst.msk [vmem:[#allocation2 + $0x100] sm:$0xff] %vm272, %v96
  %306 = vst.msk [vmem:[#allocation2 + $0x108] sm:$0xff] %vm272, %v97
  %307 = vst.msk [vmem:[#allocation2 + $0x110] sm:$0xff] %vm272, %v98
  %308 = vst.msk [vmem:[#allocation2 + $0x118] sm:$0xff] %vm272, %v99
  %309 = vst.msk [vmem:[#allocation2 + $0x120] sm:$0xff] %vm272, %v100
  %310 = vst.msk [vmem:[#allocation2 + $0x128] sm:$0xff] %vm272, %v101
  %311 = vst.msk [vmem:[#allocation2 + $0x130] sm:$0xff] %vm272, %v102
  %312 = vst.msk [vmem:[#allocation2 + $0x138] sm:$0xff] %vm272, %v103
  %313 = vst.msk [vmem:[#allocation2 + $0x140] sm:$0xff] %vm272, %v104
  %314 = vst.msk [vmem:[#allocation2 + $0x148] sm:$0xff] %vm272, %v105
  %315 = vst.msk [vmem:[#allocation2 + $0x150] sm:$0xff] %vm272, %v106
  %316 = vst.msk [vmem:[#allocation2 + $0x158] sm:$0xff] %vm272, %v107
  %317 = vst.msk [vmem:[#allocation2 + $0x160] sm:$0xff] %vm272, %v108
  %318 = vst.msk [vmem:[#allocation2 + $0x168] sm:$0xff] %vm272, %v109
  %319 = vst.msk [vmem:[#allocation2 + $0x170] sm:$0xff] %vm272, %v110
  %320 = vst.msk [vmem:[#allocation2 + $0x178] sm:$0xff] %vm272, %v111
  %321 = vst.msk [vmem:[#allocation2 + $0x180] sm:$0xff] %vm272, %v128
  %322 = vst.msk [vmem:[#allocation2 + $0x188] sm:$0xff] %vm272, %v129
  %323 = vst.msk [vmem:[#allocation2 + $0x190] sm:$0xff] %vm272, %v130
  %324 = vst.msk [vmem:[#allocation2 + $0x198] sm:$0xff] %vm272, %v131
  %325 = vst.msk [vmem:[#allocation2 + $0x1a0] sm:$0xff] %vm272, %v132
  %326 = vst.msk [vmem:[#allocation2 + $0x1a8] sm:$0xff] %vm272, %v133
  %327 = vst.msk [vmem:[#allocation2 + $0x1b0] sm:$0xff] %vm272, %v134
  %328 = vst.msk [vmem:[#allocation2 + $0x1b8] sm:$0xff] %vm272, %v135
  %329 = vst.msk [vmem:[#allocation2 + $0x1c0] sm:$0xff] %vm272, %v136
  %330 = vst.msk [vmem:[#allocation2 + $0x1c8] sm:$0xff] %vm272, %v137
  %331 = vst.msk [vmem:[#allocation2 + $0x1d0] sm:$0xff] %vm272, %v138
  %332 = vst.msk [vmem:[#allocation2 + $0x1d8] sm:$0xff] %vm272, %v139
  %333 = vst.msk [vmem:[#allocation2 + $0x1e0] sm:$0xff] %vm272, %v140
  %334 = vst.msk [vmem:[#allocation2 + $0x1e8] sm:$0xff] %vm272, %v141
  %335 = vst.msk [vmem:[#allocation2 + $0x1f0] sm:$0xff] %vm272, %v142
  %336 = vst.msk [vmem:[#allocation2 + $0x1f8] sm:$0xff] %vm272, %v143
  %337 = vst.msk [vmem:[#allocation2 + $0x200] sm:$0xff] %vm272, %v160
  %338 = vst.msk [vmem:[#allocation2 + $0x208] sm:$0xff] %vm272, %v161
  %339 = vst.msk [vmem:[#allocation2 + $0x210] sm:$0xff] %vm272, %v162
  %340 = vst.msk [vmem:[#allocation2 + $0x218] sm:$0xff] %vm272, %v163
  %341 = vst.msk [vmem:[#allocation2 + $0x220] sm:$0xff] %vm272, %v164
  %342 = vst.msk [vmem:[#allocation2 + $0x228] sm:$0xff] %vm272, %v165
  %343 = vst.msk [vmem:[#allocation2 + $0x230] sm:$0xff] %vm272, %v166
  %344 = vst.msk [vmem:[#allocation2 + $0x238] sm:$0xff] %vm272, %v167
  %345 = vst.msk [vmem:[#allocation2 + $0x240] sm:$0xff] %vm272, %v168
  %346 = vst.msk [vmem:[#allocation2 + $0x248] sm:$0xff] %vm272, %v169
  %347 = vst.msk [vmem:[#allocation2 + $0x250] sm:$0xff] %vm272, %v170
  %348 = vst.msk [vmem:[#allocation2 + $0x258] sm:$0xff] %vm272, %v171
  %349 = vst.msk [vmem:[#allocation2 + $0x260] sm:$0xff] %vm272, %v172
  %350 = vst.msk [vmem:[#allocation2 + $0x268] sm:$0xff] %vm272, %v173
  %351 = vst.msk [vmem:[#allocation2 + $0x270] sm:$0xff] %vm272, %v174
  %352 = vst.msk [vmem:[#allocation2 + $0x278] sm:$0xff] %vm272, %v175
  %353 = vst.msk [vmem:[#allocation2 + $0x280] sm:$0xff] %vm272, %v192
  %354 = vst.msk [vmem:[#allocation2 + $0x288] sm:$0xff] %vm272, %v193
  %355 = vst.msk [vmem:[#allocation2 + $0x290] sm:$0xff] %vm272, %v194
  %356 = vst.msk [vmem:[#allocation2 + $0x298] sm:$0xff] %vm272, %v195
  %357 = vst.msk [vmem:[#allocation2 + $0x2a0] sm:$0xff] %vm272, %v196
  %358 = vst.msk [vmem:[#allocation2 + $0x2a8] sm:$0xff] %vm272, %v197
  %359 = vst.msk [vmem:[#allocation2 + $0x2b0] sm:$0xff] %vm272, %v198
  %360 = vst.msk [vmem:[#allocation2 + $0x2b8] sm:$0xff] %vm272, %v199
  %361 = vst.msk [vmem:[#allocation2 + $0x2c0] sm:$0xff] %vm272, %v200
  %362 = vst.msk [vmem:[#allocation2 + $0x2c8] sm:$0xff] %vm272, %v201
  %363 = vst.msk [vmem:[#allocation2 + $0x2d0] sm:$0xff] %vm272, %v202
  %364 = vst.msk [vmem:[#allocation2 + $0x2d8] sm:$0xff] %vm272, %v203
  %365 = vst.msk [vmem:[#allocation2 + $0x2e0] sm:$0xff] %vm272, %v204
  %366 = vst.msk [vmem:[#allocation2 + $0x2e8] sm:$0xff] %vm272, %v205
  %367 = vst.msk [vmem:[#allocation2 + $0x2f0] sm:$0xff] %vm272, %v206
  %368 = vst.msk [vmem:[#allocation2 + $0x2f8] sm:$0xff] %vm272, %v207
  %369 = vst.msk [vmem:[#allocation2 + $0x300] sm:$0xff] %vm272, %v224
  %370 = vst.msk [vmem:[#allocation2 + $0x308] sm:$0xff] %vm272, %v225
  %371 = vst.msk [vmem:[#allocation2 + $0x310] sm:$0xff] %vm272, %v226
  %372 = vst.msk [vmem:[#allocation2 + $0x318] sm:$0xff] %vm272, %v227
  %373 = vst.msk [vmem:[#allocation2 + $0x320] sm:$0xff] %vm272, %v228
  %374 = vst.msk [vmem:[#allocation2 + $0x328] sm:$0xff] %vm272, %v229
  %375 = vst.msk [vmem:[#allocation2 + $0x330] sm:$0xff] %vm272, %v230
  %376 = vst.msk [vmem:[#allocation2 + $0x338] sm:$0xff] %vm272, %v231
  %377 = vst.msk [vmem:[#allocation2 + $0x340] sm:$0xff] %vm272, %v232
  %378 = vst.msk [vmem:[#allocation2 + $0x348] sm:$0xff] %vm272, %v233
  %379 = vst.msk [vmem:[#allocation2 + $0x350] sm:$0xff] %vm272, %v234
  %380 = vst.msk [vmem:[#allocation2 + $0x358] sm:$0xff] %vm272, %v235
  %381 = vst.msk [vmem:[#allocation2 + $0x360] sm:$0xff] %vm272, %v236
  %382 = vst.msk [vmem:[#allocation2 + $0x368] sm:$0xff] %vm272, %v237
  %383 = vst.msk [vmem:[#allocation2 + $0x370] sm:$0xff] %vm272, %v238
  %384 = vst.msk [vmem:[#allocation2 + $0x378] sm:$0xff] %vm272, %v239
  %385 = vst.msk [vmem:[#allocation2 + $0x380] sm:$0xff] %vm272, %v256
  %386 = vst.msk [vmem:[#allocation2 + $0x388] sm:$0xff] %vm272, %v257
  %387 = vst.msk [vmem:[#allocation2 + $0x390] sm:$0xff] %vm272, %v258
  %388 = vst.msk [vmem:[#allocation2 + $0x398] sm:$0xff] %vm272, %v259
  %389 = vst.msk [vmem:[#allocation2 + $0x3a0] sm:$0xff] %vm272, %v260
  %390 = vst.msk [vmem:[#allocation2 + $0x3a8] sm:$0xff] %vm272, %v261
  %391 = vst.msk [vmem:[#allocation2 + $0x3b0] sm:$0xff] %vm272, %v262
  %392 = vst.msk [vmem:[#allocation2 + $0x3b8] sm:$0xff] %vm272, %v263
  %393 = vst.msk [vmem:[#allocation2 + $0x3c0] sm:$0xff] %vm272, %v264
  %394 = vst.msk [vmem:[#allocation2 + $0x3c8] sm:$0xff] %vm272, %v265
  %395 = vst.msk [vmem:[#allocation2 + $0x3d0] sm:$0xff] %vm272, %v266
  %396 = vst.msk [vmem:[#allocation2 + $0x3d8] sm:$0xff] %vm272, %v267
  %397 = vst.msk [vmem:[#allocation2 + $0x3e0] sm:$0xff] %vm272, %v268
  %398 = vst.msk [vmem:[#allocation2 + $0x3e8] sm:$0xff] %vm272, %v269
  %399 = vst.msk [vmem:[#allocation2 + $0x3f0] sm:$0xff] %vm272, %v270
  %400 = vst.msk [vmem:[#allocation2 + $0x3f8] sm:$0xff] %vm272, %v271
  %v401 = vld [vmem:[#allocation2] ss:$2 sm:$0xff]
  %s402 = scalar_lea.vmem [#allocation2], 16
  %v403 = vld [vmem:[%s402] ss:$2 sm:$0xff]
  %s404 = scalar_lea.vmem [#allocation2], 32
  %v405 = vld [vmem:[%s404] ss:$2 sm:$0xff]
  %s406 = scalar_lea.vmem [#allocation2], 48
  %v407 = vld [vmem:[%s406] ss:$2 sm:$0xff]
  %s408 = scalar_lea.vmem [#allocation2], 64
  %v409 = vld [vmem:[%s408] ss:$2 sm:$0xff]
  %s410 = scalar_lea.vmem [#allocation2], 80
  %v411 = vld [vmem:[%s410] ss:$2 sm:$0xff]
  %s412 = scalar_lea.vmem [#allocation2], 96
  %v413 = vld [vmem:[%s412] ss:$2 sm:$0xff]
  %s414 = scalar_lea.vmem [#allocation2], 112
  %v415 = vld [vmem:[%s414] ss:$2 sm:$0xff]
  %s416 = scalar_lea.vmem [#allocation2], 128
  %v417 = vld [vmem:[%s416] ss:$2 sm:$0xff]
  %s418 = scalar_lea.vmem [#allocation2], 144
  %v419 = vld [vmem:[%s418] ss:$2 sm:$0xff]
  %s420 = scalar_lea.vmem [#allocation2], 160
  %v421 = vld [vmem:[%s420] ss:$2 sm:$0xff]
  %s422 = scalar_lea.vmem [#allocation2], 176
  %v423 = vld [vmem:[%s422] ss:$2 sm:$0xff]
  %s424 = scalar_lea.vmem [#allocation2], 192
  %v425 = vld [vmem:[%s424] ss:$2 sm:$0xff]
  %s426 = scalar_lea.vmem [#allocation2], 208
  %v427 = vld [vmem:[%s426] ss:$2 sm:$0xff]
  %s428 = scalar_lea.vmem [#allocation2], 224
  %v429 = vld [vmem:[%s428] ss:$2 sm:$0xff]
  %s430 = scalar_lea.vmem [#allocation2], 240
  %v431 = vld [vmem:[%s430] ss:$2 sm:$0xff]
  %s432 = scalar_lea.vmem [#allocation2], 256
  %v433 = vld [vmem:[%s432] ss:$2 sm:$0xff]
  %s434 = scalar_lea.vmem [#allocation2], 272
  %v435 = vld [vmem:[%s434] ss:$2 sm:$0xff]
  %s436 = scalar_lea.vmem [#allocation2], 288
  %v437 = vld [vmem:[%s436] ss:$2 sm:$0xff]
  %s438 = scalar_lea.vmem [#allocation2], 304
  %v439 = vld [vmem:[%s438] ss:$2 sm:$0xff]
  %s440 = scalar_lea.vmem [#allocation2], 320
  %v441 = vld [vmem:[%s440] ss:$2 sm:$0xff]
  %s442 = scalar_lea.vmem [#allocation2], 336
  %v443 = vld [vmem:[%s442] ss:$2 sm:$0xff]
  %s444 = scalar_lea.vmem [#allocation2], 352
  %v445 = vld [vmem:[%s444] ss:$2 sm:$0xff]
  %s446 = scalar_lea.vmem [#allocation2], 368
  %v447 = vld [vmem:[%s446] ss:$2 sm:$0xff]
  %s448 = scalar_lea.vmem [#allocation2], 384
  %v449 = vld [vmem:[%s448] ss:$2 sm:$0xff]
  %s450 = scalar_lea.vmem [#allocation2], 400
  %v451 = vld [vmem:[%s450] ss:$2 sm:$0xff]
  %s452 = scalar_lea.vmem [#allocation2], 416
  %v453 = vld [vmem:[%s452] ss:$2 sm:$0xff]
  %s454 = scalar_lea.vmem [#allocation2], 432
  %v455 = vld [vmem:[%s454] ss:$2 sm:$0xff]
  %s456 = scalar_lea.vmem [#allocation2], 448
  %v457 = vld [vmem:[%s456] ss:$2 sm:$0xff]
  %s458 = scalar_lea.vmem [#allocation2], 464
  %v459 = vld [vmem:[%s458] ss:$2 sm:$0xff]
  %s460 = scalar_lea.vmem [#allocation2], 480
  %v461 = vld [vmem:[%s460] ss:$2 sm:$0xff]
  %s462 = scalar_lea.vmem [#allocation2], 496
  %v463 = vld [vmem:[%s462] ss:$2 sm:$0xff]
  %s464 = scalar_lea.vmem [#allocation2], 512
  %v465 = vld [vmem:[%s464] ss:$2 sm:$0xff]
  %s466 = scalar_lea.vmem [#allocation2], 528
  %v467 = vld [vmem:[%s466] ss:$2 sm:$0xff]
  %s468 = scalar_lea.vmem [#allocation2], 544
  %v469 = vld [vmem:[%s468] ss:$2 sm:$0xff]
  %s470 = scalar_lea.vmem [#allocation2], 560
  %v471 = vld [vmem:[%s470] ss:$2 sm:$0xff]
  %s472 = scalar_lea.vmem [#allocation2], 576
  %v473 = vld [vmem:[%s472] ss:$2 sm:$0xff]
  %s474 = scalar_lea.vmem [#allocation2], 592
  %v475 = vld [vmem:[%s474] ss:$2 sm:$0xff]
  %s476 = scalar_lea.vmem [#allocation2], 608
  %v477 = vld [vmem:[%s476] ss:$2 sm:$0xff]
  %s478 = scalar_lea.vmem [#allocation2], 624
  %v479 = vld [vmem:[%s478] ss:$2 sm:$0xff]
  %s480 = scalar_lea.vmem [#allocation2], 640
  %v481 = vld [vmem:[%s480] ss:$2 sm:$0xff]
  %s482 = scalar_lea.vmem [#allocation2], 656
  %v483 = vld [vmem:[%s482] ss:$2 sm:$0xff]
  %s484 = scalar_lea.vmem [#allocation2], 672
  %v485 = vld [vmem:[%s484] ss:$2 sm:$0xff]
  %s486 = scalar_lea.vmem [#allocation2], 688
  %v487 = vld [vmem:[%s486] ss:$2 sm:$0xff]
  %s488 = scalar_lea.vmem [#allocation2], 704
  %v489 = vld [vmem:[%s488] ss:$2 sm:$0xff]
  %s490 = scalar_lea.vmem [#allocation2], 720
  %v491 = vld [vmem:[%s490] ss:$2 sm:$0xff]
  %s492 = scalar_lea.vmem [#allocation2], 736
  %v493 = vld [vmem:[%s492] ss:$2 sm:$0xff]
  %s494 = scalar_lea.vmem [#allocation2], 752
  %v495 = vld [vmem:[%s494] ss:$2 sm:$0xff]
  %s496 = scalar_lea.vmem [#allocation2], 768
  %v497 = vld [vmem:[%s496] ss:$2 sm:$0xff]
  %s498 = scalar_lea.vmem [#allocation2], 784
  %v499 = vld [vmem:[%s498] ss:$2 sm:$0xff]
  %s500 = scalar_lea.vmem [#allocation2], 800
  %v501 = vld [vmem:[%s500] ss:$2 sm:$0xff]
  %s502 = scalar_lea.vmem [#allocation2], 816
  %v503 = vld [vmem:[%s502] ss:$2 sm:$0xff]
  %s504 = scalar_lea.vmem [#allocation2], 832
  %v505 = vld [vmem:[%s504] ss:$2 sm:$0xff]
  %s506 = scalar_lea.vmem [#allocation2], 848
  %v507 = vld [vmem:[%s506] ss:$2 sm:$0xff]
  %s508 = scalar_lea.vmem [#allocation2], 864
  %v509 = vld [vmem:[%s508] ss:$2 sm:$0xff]
  %s510 = scalar_lea.vmem [#allocation2], 880
  %v511 = vld [vmem:[%s510] ss:$2 sm:$0xff]
  %s512 = scalar_lea.vmem [#allocation2], 896
  %v513 = vld [vmem:[%s512] ss:$2 sm:$0xff]
  %s514 = scalar_lea.vmem [#allocation2], 912
  %v515 = vld [vmem:[%s514] ss:$2 sm:$0xff]
  %s516 = scalar_lea.vmem [#allocation2], 928
  %v517 = vld [vmem:[%s516] ss:$2 sm:$0xff]
  %s518 = scalar_lea.vmem [#allocation2], 944
  %v519 = vld [vmem:[%s518] ss:$2 sm:$0xff]
  %s520 = scalar_lea.vmem [#allocation2], 960
  %v521 = vld [vmem:[%s520] ss:$2 sm:$0xff]
  %s522 = scalar_lea.vmem [#allocation2], 976
  %v523 = vld [vmem:[%s522] ss:$2 sm:$0xff]
  %s524 = scalar_lea.vmem [#allocation2], 992
  %v525 = vld [vmem:[%s524] ss:$2 sm:$0xff]
  %s526 = scalar_lea.vmem [#allocation2], 1008
  %v527 = vld [vmem:[%s526] ss:$2 sm:$0xff]
  %528 = vxpose.xlu0.b32.start [1/16] %v401, 128
  %529 = vxpose.xlu0.b32.cont [2/16] %v403, 128
  %530 = vxpose.xlu0.b32.cont [3/16] %v405, 128
  %531 = vxpose.xlu0.b32.cont [4/16] %v407, 128
  %532 = vxpose.xlu0.b32.cont [5/16] %v409, 128
  %533 = vxpose.xlu0.b32.cont [6/16] %v411, 128
  %534 = vxpose.xlu0.b32.cont [7/16] %v413, 128
  %535 = vxpose.xlu0.b32.cont [8/16] %v415, 128
  %536 = vxpose.xlu0.b32.cont [9/16] %v417, 128
  %537 = vxpose.xlu0.b32.cont [10/16] %v419, 128
  %538 = vxpose.xlu0.b32.cont [11/16] %v421, 128
  %539 = vxpose.xlu0.b32.cont [12/16] %v423, 128
  %540 = vxpose.xlu0.b32.cont [13/16] %v425, 128
  %541 = vxpose.xlu0.b32.cont [14/16] %v427, 128
  %542 = vxpose.xlu0.b32.cont [15/16] %v429, 128
  %543 = vxpose.xlu0.b32.end [16/16] %v431, 128
  %v544 = vpop.trf.xlu0
  %v545 = vpop.trf.xlu0
  %v546 = vpop.trf.xlu0
  %v547 = vpop.trf.xlu0
  %v548 = vpop.trf.xlu0
  %v549 = vpop.trf.xlu0
  %v550 = vpop.trf.xlu0
  %v551 = vpop.trf.xlu0
  %v552 = vpop.trf.xlu0
  %v553 = vpop.trf.xlu0
  %v554 = vpop.trf.xlu0
  %v555 = vpop.trf.xlu0
  %v556 = vpop.trf.xlu0
  %v557 = vpop.trf.xlu0
  %v558 = vpop.trf.xlu0
  %v559 = vpop.trf.xlu0
  %560 = vxpose.xlu0.b32.start [1/16] %v433, 128
  %561 = vxpose.xlu0.b32.cont [2/16] %v435, 128
  %562 = vxpose.xlu0.b32.cont [3/16] %v437, 128
  %563 = vxpose.xlu0.b32.cont [4/16] %v439, 128
  %564 = vxpose.xlu0.b32.cont [5/16] %v441, 128
  %565 = vxpose.xlu0.b32.cont [6/16] %v443, 128
  %566 = vxpose.xlu0.b32.cont [7/16] %v445, 128
  %567 = vxpose.xlu0.b32.cont [8/16] %v447, 128
  %568 = vxpose.xlu0.b32.cont [9/16] %v449, 128
  %569 = vxpose.xlu0.b32.cont [10/16] %v451, 128
  %570 = vxpose.xlu0.b32.cont [11/16] %v453, 128
  %571 = vxpose.xlu0.b32.cont [12/16] %v455, 128
  %572 = vxpose.xlu0.b32.cont [13/16] %v457, 128
  %573 = vxpose.xlu0.b32.cont [14/16] %v459, 128
  %574 = vxpose.xlu0.b32.cont [15/16] %v461, 128
  %575 = vxpose.xlu0.b32.end [16/16] %v463, 128
  %v576 = vpop.trf.xlu0
  %v577 = vpop.trf.xlu0
  %v578 = vpop.trf.xlu0
  %v579 = vpop.trf.xlu0
  %v580 = vpop.trf.xlu0
  %v581 = vpop.trf.xlu0
  %v582 = vpop.trf.xlu0
  %v583 = vpop.trf.xlu0
  %v584 = vpop.trf.xlu0
  %v585 = vpop.trf.xlu0
  %v586 = vpop.trf.xlu0
  %v587 = vpop.trf.xlu0
  %v588 = vpop.trf.xlu0
  %v589 = vpop.trf.xlu0
  %v590 = vpop.trf.xlu0
  %v591 = vpop.trf.xlu0
  %592 = vxpose.xlu0.b32.start [1/16] %v465, 128
  %593 = vxpose.xlu0.b32.cont [2/16] %v467, 128
  %594 = vxpose.xlu0.b32.cont [3/16] %v469, 128
  %595 = vxpose.xlu0.b32.cont [4/16] %v471, 128
  %596 = vxpose.xlu0.b32.cont [5/16] %v473, 128
  %597 = vxpose.xlu0.b32.cont [6/16] %v475, 128
  %598 = vxpose.xlu0.b32.cont [7/16] %v477, 128
  %599 = vxpose.xlu0.b32.cont [8/16] %v479, 128
  %600 = vxpose.xlu0.b32.cont [9/16] %v481, 128
  %601 = vxpose.xlu0.b32.cont [10/16] %v483, 128
  %602 = vxpose.xlu0.b32.cont [11/16] %v485, 128
  %603 = vxpose.xlu0.b32.cont [12/16] %v487, 128
  %604 = vxpose.xlu0.b32.cont [13/16] %v489, 128
  %605 = vxpose.xlu0.b32.cont [14/16] %v491, 128
  %606 = vxpose.xlu0.b32.cont [15/16] %v493, 128
  %607 = vxpose.xlu0.b32.end [16/16] %v495, 128
  %v608 = vpop.trf.xlu0
  %v609 = vpop.trf.xlu0
  %v610 = vpop.trf.xlu0
  %v611 = vpop.trf.xlu0
  %v612 = vpop.trf.xlu0
  %v613 = vpop.trf.xlu0
  %v614 = vpop.trf.xlu0
  %v615 = vpop.trf.xlu0
  %v616 = vpop.trf.xlu0
  %v617 = vpop.trf.xlu0
  %v618 = vpop.trf.xlu0
  %v619 = vpop.trf.xlu0
  %v620 = vpop.trf.xlu0
  %v621 = vpop.trf.xlu0
  %v622 = vpop.trf.xlu0
  %v623 = vpop.trf.xlu0
  %624 = vxpose.xlu0.b32.start [1/16] %v497, 128
  %625 = vxpose.xlu0.b32.cont [2/16] %v499, 128
  %626 = vxpose.xlu0.b32.cont [3/16] %v501, 128
  %627 = vxpose.xlu0.b32.cont [4/16] %v503, 128
  %628 = vxpose.xlu0.b32.cont [5/16] %v505, 128
  %629 = vxpose.xlu0.b32.cont [6/16] %v507, 128
  %630 = vxpose.xlu0.b32.cont [7/16] %v509, 128
  %631 = vxpose.xlu0.b32.cont [8/16] %v511, 128
  %632 = vxpose.xlu0.b32.cont [9/16] %v513, 128
  %633 = vxpose.xlu0.b32.cont [10/16] %v515, 128
  %634 = vxpose.xlu0.b32.cont [11/16] %v517, 128
  %635 = vxpose.xlu0.b32.cont [12/16] %v519, 128
  %636 = vxpose.xlu0.b32.cont [13/16] %v521, 128
  %637 = vxpose.xlu0.b32.cont [14/16] %v523, 128
  %638 = vxpose.xlu0.b32.cont [15/16] %v525, 128
  %639 = vxpose.xlu0.b32.end [16/16] %v527, 128
  %v640 = vpop.trf.xlu0
  %v641 = vpop.trf.xlu0
  %v642 = vpop.trf.xlu0
  %v643 = vpop.trf.xlu0
  %v644 = vpop.trf.xlu0
  %v645 = vpop.trf.xlu0
  %v646 = vpop.trf.xlu0
  %v647 = vpop.trf.xlu0
  %v648 = vpop.trf.xlu0
  %v649 = vpop.trf.xlu0
  %v650 = vpop.trf.xlu0
  %v651 = vpop.trf.xlu0
  %v652 = vpop.trf.xlu0
  %v653 = vpop.trf.xlu0
  %v654 = vpop.trf.xlu0
  %v655 = vpop.trf.xlu0
  %656 = vst [vmem:[%s1] sm:$0xff] %v544
  %657 = vst [vmem:[%s1 + $0x8] sm:$0xff] %v576
  %658 = vst [vmem:[%s1 + $0x10] sm:$0xff] %v608
  %659 = vst [vmem:[%s1 + $0x18] sm:$0xff] %v640
  // Predicated region
  $region6: #{dense_dilated.1} parent=0 // pred_check
    _
  $region7: #{dense_dilated.1} parent=0 // pred_check_branch
    %661 = sbr.rel (0) target = $region9
  $region8: #{dense_dilated.1} parent=0 // pred_region
    _
  $region9: #{dense_dilated.1} parent=0 // pred_fallthru
    _
  // Predicated region
  $region10: #{dense_dilated.1} parent=0 // pred_check
    _
  $region11: #{dense_dilated.1} parent=0 // pred_check_branch
    %663 = sbr.rel (0) target = $region13
  $region12: #{dense_dilated.1} parent=0 // pred_region
    _
  $region13: #{dense_dilated.1} parent=0 // pred_fallthru
    _

</llo_original>
